<compile_context>
chip_gen: v5e
topology: v5e:2x2
jax: 0.10.0
libtpu: 0.0.40
codegen_flags: <defaults>
</compile_context>

<pallas_src>
import functools

import jax
import jax.numpy as jnp
from jax.experimental import pallas as pl
from jax.experimental.pallas import tpu as pltpu


def _reward_gather_kernel(table3_ref, flat_ref, out_ref, *,
                          R, C, shift, lane_mask, chunk):
    """Gather table[rows, cols] for one lane tile.

    table3_ref: (3R, C) bf16  -- exact hi/mid/lo bf16 split of the f32 table.
    flat_ref:   (1, tile_n) int32 packed indices: rows * next_pow2(C) + cols.
    out_ref:    (1, tile_n) f32.
    """
    tile_n = out_ref.shape[-1]
    table3 = table3_ref[...]                                    # (3R, C) bf16, tiny

    # Hoisted iotas, shared by all (equal-size) chunks — JAX does not CSE
    # broadcast_in_dim, so build them once outside the chunk loop.
    col_iota = jax.lax.broadcasted_iota(jnp.int32, (C, chunk), 0)
    row_iota = jax.lax.broadcasted_iota(jnp.int32, (R, chunk), 0)

    # Process the tile in <=1024-lane chunks so the (C, chunk) one-hot and the
    # (3R, chunk) MXU result never blow up the vreg file (chunked row-reduce).
    for off in range(0, tile_n, chunk):
        flat = flat_ref[:, off:off + chunk]                     # (1, chunk) int32
        rows = flat >> shift                                    # 2 VPU ops / vreg
        cols = flat & lane_mask

        # Column one-hot built directly in bf16 (0/1 exact in bf16): half the
        # VPU build + MXU weight-push bytes vs f32.
        col_oh = (col_iota == cols).astype(jnp.bfloat16)        # (C, chunk)

        # Single-pass bf16 MXU matmul with f32 accumulation.  Precision is
        # pinned by construction: bf16 x {0,1} products are exact, so no
        # multi-pass f32 emulation (DEFAULT/HIGHEST) is needed.
        sel = jax.lax.dot_general(
            table3, col_oh,
            (((1,), (0,)), ((), ())),
            preferred_element_type=jnp.float32,
        )                                                        # (3R, chunk) f32

        # Exact f32 reconstruction: hi + mid + lo == table (non-overlapping
        # bf16 parts; each partial sum is exactly representable).
        comb = sel[0:R] + sel[R:2 * R] + sel[2 * R:3 * R]        # (R, chunk) f32

        # Row pick: select + sublane reduce (no f32 one-hot multiply).
        picked = jnp.where(row_iota == rows, comb, 0.0)
        out_ref[:, off:off + chunk] = jnp.sum(picked, axis=0, keepdims=True)


def _round_up(x, m):
    return (x + m - 1) // m * m


def _split_table_bf16(table_f32):
    """Exact 3-way bf16 split: hi + mid + lo == table (finite f32, bitwise)."""
    hi = table_f32.astype(jnp.bfloat16)
    r1 = table_f32 - hi.astype(jnp.float32)
    mid = r1.astype(jnp.bfloat16)
    lo = (r1 - mid.astype(jnp.float32)).astype(jnp.bfloat16)
    return jnp.concatenate([hi, mid, lo], axis=0)                # (3R, C) bf16


def reward_table_forward(table, indices, *, max_tile_n=2048):
    """table: (R, C) f32, indices: (2, N) int -> (N,) f32 gather table[i0, i1]."""
    R, C = table.shape
    _, N = indices.shape

    LANE = 128
    CHUNK = 1024

    # Pack (row, col) into one int32 lane; power-of-two stride => shift/mask
    # decode in-kernel.  One index operand instead of two.
    cpow2 = pl.next_power_of_2(C)
    assert R * cpow2 < 2 ** 31
    shift = cpow2.bit_length() - 1
    idx = indices.astype(jnp.int32)
    flat = idx[0, :] * cpow2 + idx[1, :]                         # (N,)

    # Tile selection:
    #  * lane-dense (1, tile_n) tiles, tile_n a multiple of 128;
    #  * >= 2 grid steps once there are >= 2 lane tiles (v7x megacore sharding
    #    via dimension_semantics=("parallel",)); extra step is noise on v5e/v6e;
    #  * large N: tiles up to max_tile_n (multiple of the 1024-lane in-kernel
    #    chunk) to amortize per-grid-step pipeline overhead.
    lanes = _round_up(N, LANE)
    half = _round_up(max(lanes // 2, LANE), LANE)
    if half <= CHUNK:
        tile_n = half
    else:
        tile_n = min(_round_up(half, CHUNK), _round_up(max_tile_n, CHUNK))
    n_pad = _round_up(N, tile_n)
    chunk = min(CHUNK, tile_n)
    assert tile_n % chunk == 0

    if n_pad != N:
        flat = jnp.pad(flat, (0, n_pad - N))       # pad index (0,0): sliced off below
    flat = flat.reshape(1, n_pad)

    # Exact bf16 split of the f32 table (for a real model this is precomputed
    # once from the parameter, not per forward call).
    table3 = _split_table_bf16(table.astype(jnp.float32))        # (3R, C) bf16

    kernel = functools.partial(
        _reward_gather_kernel,
        R=R, C=C, shift=shift, lane_mask=cpow2 - 1, chunk=chunk)

    # TODO(synk): for multi-MiB tables, mark the table spec
    #   pipeline_mode=pl.Buffered(1) (constant block index) and add a C-tiling
    #   "arbitrary" grid axis with a pl.when-guarded accumulator so the kernel
    #   stays inside v7x's 64 MiB VMEM without raising vmem_limit_bytes.
    # TODO(synk): evaluate an in-kernel flat jnp.take lane-gather (the table is
    #   only 2 f32 vregs); keep the one-hot matmul as the portable fallback.
    out = pl.pallas_call(
        kernel,
        out_shape=jax.ShapeDtypeStruct((1, n_pad), jnp.float32),
        grid_spec=pltpu.PrefetchScalarGridSpec(
            num_scalar_prefetch=0,
            grid=(n_pad // tile_n,),
            in_specs=[
                pl.BlockSpec((3 * R, C), lambda i: (0, 0)),      # full split table
                pl.BlockSpec((1, tile_n), lambda i: (0, i)),     # packed indices
            ],
            out_specs=pl.BlockSpec((1, tile_n), lambda i: (0, i)),
        ),
        compiler_params=pltpu.CompilerParams(
            dimension_semantics=("parallel",),
        ),
    )(table3, flat)
    return out[0, :N]


if __name__ == "__main__":
    key = jax.random.PRNGKey(0)
    k_table, k_rows, k_cols = jax.random.split(key, 3)

    R, C = 16, 128       # RewardTable(shape=(16, 128))
    N = 200              # number of index pairs (deliberately not a tile multiple)

    table = jax.random.normal(k_table, (R, C), dtype=jnp.float32)
    row_idx = jax.random.randint(k_rows, (N,), 0, R, dtype=jnp.int32)
    col_idx = jax.random.randint(k_cols, (N,), 0, C, dtype=jnp.int32)
    indices = jnp.stack([row_idx, col_idx], axis=0)  # (2, N)

    out = reward_table_forward(table, indices)
    out = jax.block_until_ready(out)

    # Reference (plain JAX advanced indexing, same semantics as torch).
    ref = table[indices[0], indices[1]]
    assert out.shape == (N,)
    assert jnp.allclose(out, ref, atol=1e-6), "mismatch vs reference gather"

    print("KERNEL_OK")
</pallas_src>

<mosaic_0001>
module attributes {stable_mosaic.version = 11 : i64} {
  func.func @_reward_gather_kernel(%arg0: i32, %arg1: memref<48x128xbf16, #tpu.memory_space<vmem>>, %arg2: memref<1x128xi32, #tpu.memory_space<vmem>>, %arg3: memref<1x128xf32, #tpu.memory_space<vmem>>) attributes {dimension_semantics = [#tpu.dimension_semantics<parallel>], iteration_bounds = array<i64: 2>, scalar_prefetch = 0 : i64, scratch_operands = 0 : i64, tpu.core_type = #tpu.core_type<tc>, window_params = [{pipeline_mode = #tpu.pipeline_mode<synchronous>, transform_indices = @transform_0, window_bounds = array<i64: 48, 128>}, {transform_indices = @transform_1, window_bounds = array<i64: 1, 128>}, {transform_indices = @transform_2, window_bounds = array<i64: 1, 128>}]} {
    %c0 = arith.constant 0 : index
    %c0_0 = arith.constant 0 : index
    %0 = vector.load %arg1[%c0, %c0_0] : memref<48x128xbf16, #tpu.memory_space<vmem>>, vector<48x128xbf16>
    %1 = tpu.iota {dimensions = array<i32: 0>} : vector<128x128xi32>
    %2 = tpu.iota {dimensions = array<i32: 0>} : vector<16x128xi32>
    %c0_1 = arith.constant 0 : index
    %c0_2 = arith.constant 0 : index
    %3 = vector.load %arg2[%c0_1, %c0_2] : memref<1x128xi32, #tpu.memory_space<vmem>>, vector<1x128xi32>
    %c7_i32 = arith.constant 7 : i32
    %4 = vector.broadcast %c7_i32 : i32 to vector<1x128xi32>
    %5 = arith.shrsi %3, %4 : vector<1x128xi32>
    %c127_i32 = arith.constant 127 : i32
    %6 = vector.broadcast %c127_i32 : i32 to vector<1x128xi32>
    %7 = arith.andi %3, %6 : vector<1x128xi32>
    %8 = vector.broadcast %7 : vector<1x128xi32> to vector<128x128xi32>
    %9 = arith.cmpi eq, %1, %8 : vector<128x128xi32>
    %10 = arith.extui %9 : vector<128x128xi1> to vector<128x128xi32>
    %11 = arith.sitofp %10 : vector<128x128xi32> to vector<128x128xf32>
    %12 = arith.truncf %11 : vector<128x128xf32> to vector<128x128xbf16>
    %cst = arith.constant dense<0.000000e+00> : vector<48x128xf32>
    %13 = tpu.matmul %0, %12, %cst {dimension_numbers = #tpu.dot_dimension_numbers<[1], [0], [0], [1], [0, 0, 1, 1], [], []>} : vector<48x128xbf16>, vector<128x128xbf16>, vector<48x128xf32> -> vector<48x128xf32>
    %14 = vector.extract_strided_slice %13 {offsets = [0, 0], sizes = [16, 128], strides = [1, 1]} : vector<48x128xf32> to vector<16x128xf32>
    %15 = vector.extract_strided_slice %13 {offsets = [16, 0], sizes = [16, 128], strides = [1, 1]} : vector<48x128xf32> to vector<16x128xf32>
    %16 = arith.addf %14, %15 : vector<16x128xf32>
    %17 = vector.extract_strided_slice %13 {offsets = [32, 0], sizes = [16, 128], strides = [1, 1]} : vector<48x128xf32> to vector<16x128xf32>
    %18 = arith.addf %16, %17 : vector<16x128xf32>
    %19 = vector.broadcast %5 : vector<1x128xi32> to vector<16x128xi32>
    %20 = arith.cmpi eq, %2, %19 : vector<16x128xi32>
    %cst_3 = arith.constant 0.000000e+00 : f32
    %21 = vector.broadcast %cst_3 : f32 to vector<16x128xf32>
    %22 = arith.select %20, %18, %21 : vector<16x128xi1>, vector<16x128xf32>
    %cst_4 = arith.constant dense<0.000000e+00> : vector<128xf32>
    %23 = vector.multi_reduction <add>, %22, %cst_4 [0] : vector<16x128xf32> to vector<128xf32>
    %24 = vector.shape_cast %23 : vector<128xf32> to vector<1x128xf32>
    %c0_5 = arith.constant 0 : index
    %c0_6 = arith.constant 0 : index
    %25 = vector.load %arg3[%c0_5, %c0_6] : memref<1x128xf32, #tpu.memory_space<vmem>>, vector<1x128xf32>
    tpu.vector_store %arg3[%c0_5, %c0_6], %24 {strides = array<i32>} : memref<1x128xf32, #tpu.memory_space<vmem>>, vector<1x128xf32>,
    return
  }
  func.func @transform_0(%arg0: i32) -> (i32, i32) {
    %c0_i32 = arith.constant 0 : i32
    %c0_i32_0 = arith.constant 0 : i32
    %c0_i32_1 = arith.constant 0 : i32
    return %c0_i32, %c0_i32_0 : i32, i32
  }
  func.func @transform_1(%arg0: i32) -> (i32, i32) {
    %c0_i32 = arith.constant 0 : i32
    %c0_i32_0 = arith.constant 0 : i32
    return %c0_i32, %arg0 : i32, i32
  }
  func.func @transform_2(%arg0: i32) -> (i32, i32) {
    %c0_i32 = arith.constant 0 : i32
    %c0_i32_0 = arith.constant 0 : i32
    return %c0_i32, %arg0 : i32, i32
  }
}

</mosaic_0001>

<llo_original>
// kernel: tpu_custom_call.1
$region0: #{tpu_custom_call.1}
  #allocation0 [shape = 'u32[]', space=smem, size = 0x4, offset = 0x4, fixed_abs, tag = 'smem constant byte address 0x4 - core index']
  #allocation1 [shape = 'u32[72,128]{1,0:T(1,128)}', space=vmem, size = 0x9000, scoped, tag = 'internal scratch']
  %s0 = inlined_call_operand.hbm [shape: bf16[48,128], index: 0, kind: input, shape index: {}]
  %s1 = inlined_call_operand.hbm [shape: s32[1,256], index: 1, kind: input, shape index: {}]
  %s2 = inlined_call_operand.hbm [shape: f32[1,256], index: 2, kind: output, shape index: {}]
  %s3 = sld [smem:[#allocation0]]
  $region49: #{tpu_custom_call.1} parent=0
    _
  %s5 = ssub.s32 1, %s3
  %s6 = scalar_select 0, %s5, %s3
  $region1: #{tpu_custom_call.1} parent=0
    #allocation2 [shape = 'u8[12288]{0}', space=vmem, size = 0x3000, scoped, tag = 'input window, operand 0, single buffered']
    #allocation3 [shape = 's32[2]{0}', space=sflag, size = 0x8, scoped, tag = 'scoped memory for tpu_custom_call.1']
    #allocation4 [shape = 's32[2]{0}', space=sflag, size = 0x8, scoped, tag = 'scoped memory for tpu_custom_call.1']
    #allocation5 [shape = 'u8[1024]{0}', space=vmem, size = 0x400, scoped, tag = 'input window, operand 1']
    #allocation6 [shape = 's32[2]{0}', space=sflag, size = 0x8, scoped, tag = 'scoped memory for tpu_custom_call.1']
    #allocation7 [shape = 'u8[1024]{0}', space=vmem, size = 0x400, scoped, tag = 'output window, operand 0']
    %7 = vsyncpa [#allocation3], 0
    %8 = vsyncpa [#allocation6], 0
    %s9 = scalar_lea.sflag [#allocation6], 1
    %10 = vsyncpa %s9, 0
    %11 = vsyncpa [#allocation4], 0
    %s12 = scalar_lea.sflag [#allocation4], 1
    %13 = vsyncpa %s12, 0
    loop: start=0, step=1, limit=4
    $region2: #{tpu_custom_call.1} parent=1 // loop_pre_header
      _
    $region3: #{tpu_custom_call.1} parent=1 // loop_header
      %s15 = sphi 0, %s19
      %p16 = scmp.ge.s32.totalorder %s15, 4
      %s23 = sphi 0, %s23
      %s25 = sphi 0, %s23
      %s26 = sphi 0, %s25
      %s40 = sphi 0, %s26
      %s46 = sphi 0, %s48
      %s49 = sphi 0, %s46
      %s50 = sphi 0, %s49
      %s66 = sphi 0, %s50
      %s72 = sphi 0, %s74
      %s75 = sphi 0, %s72
      %s76 = sphi 0, %s75
      %s92 = sphi 0, %s76
    $region4: #{tpu_custom_call.1} parent=1 // loop_header_branch
      %18 = sbr.rel (%p16) target = $region8
    $region5: #{tpu_custom_call.1} parent=1 // loop_body
      %s20 = ssub.s32 %s15, 1
      %s21 = ssub.s32 %s15, 2
      %s22 = sadd.s32 %s15, 1
      %s24 = sadd.s32 %s23, 1
      %p27 = scmp.eq.s32.totalorder %s15, 1
      %p28 = scmp.ne.s32.totalorder %s23, %s25
      %p29 = scmp.eq.s32.totalorder %s15, 0
      %p30 = por %p28, %p29
      %p31 = scmp.ne.s32.totalorder %s23, %s25
      %p32 = scmp.eq.s32.totalorder %s20, 1
      %p33 = por %p31, %p32
      %p34 = scmp.ne.s32.totalorder %s25, %s26
      %p35 = scmp.eq.s32.totalorder %s20, 0
      %p36 = por %p34, %p35
      %p37 = scmp.ne.s32.totalorder %s25, %s26
      %p38 = scmp.eq.s32.totalorder %s21, 1
      %p39 = por %p37, %p38
      %p41 = scmp.ne.s32.totalorder %s26, %s40
      %p42 = scmp.eq.s32.totalorder %s21, 0
      %p43 = por %p41, %p42
      %s44 = ssub.s32 %s15, %s22
      %p45 = scmp.eq.s32.totalorder %s44, 0
      %s47 = sadd.s32 %s46, 1
      %s48 = scalar_select %p45, %s46, %s47
      %p51 = pneg %p45
      %p52 = scmp.eq.s32.totalorder %s15, 1
      %p53 = por %p51, %p52
      %p54 = scmp.ne.s32.totalorder %s46, %s49
      %p55 = scmp.eq.s32.totalorder %s15, 0
      %p56 = por %p54, %p55
      %p57 = scmp.ne.s32.totalorder %s46, %s49
      %p58 = scmp.eq.s32.totalorder %s20, 1
      %p59 = por %p57, %p58
      %p60 = scmp.ne.s32.totalorder %s49, %s50
      %p61 = scmp.eq.s32.totalorder %s20, 0
      %p62 = por %p60, %p61
      %p63 = scmp.ne.s32.totalorder %s49, %s50
      %p64 = scmp.eq.s32.totalorder %s21, 1
      %p65 = por %p63, %p64
      %p67 = scmp.ne.s32.totalorder %s50, %s66
      %p68 = scmp.eq.s32.totalorder %s21, 0
      %p69 = por %p67, %p68
      %s70 = ssub.s32 %s15, %s22
      %p71 = scmp.eq.s32.totalorder %s70, 0
      %s73 = sadd.s32 %s72, 1
      %s74 = scalar_select %p71, %s72, %s73
      %p77 = pneg %p71
      %p78 = scmp.eq.s32.totalorder %s15, 1
      %p79 = por %p77, %p78
      %p80 = scmp.ne.s32.totalorder %s72, %s75
      %p81 = scmp.eq.s32.totalorder %s15, 0
      %p82 = por %p80, %p81
      %p83 = scmp.ne.s32.totalorder %s72, %s75
      %p84 = scmp.eq.s32.totalorder %s20, 1
      %p85 = por %p83, %p84
      %p86 = scmp.ne.s32.totalorder %s75, %s76
      %p87 = scmp.eq.s32.totalorder %s20, 0
      %p88 = por %p86, %p87
      %p89 = scmp.ne.s32.totalorder %s75, %s76
      %p90 = scmp.eq.s32.totalorder %s21, 1
      %p91 = por %p89, %p90
      %p93 = scmp.ne.s32.totalorder %s76, %s92
      %p94 = scmp.eq.s32.totalorder %s21, 0
      %p95 = por %p93, %p94
      %p96 = scmp.le.s32.totalorder 1, %s15
      %p97 = scmp.lt.s32.totalorder %s15, 3
      %p98 = pnand %p96, %p97
      %p99 = pneg %p98
      // Predicated region
      $region9: #{tpu_custom_call.1} parent=5 // pred_check
        _
      $region10: #{tpu_custom_call.1} parent=5 // pred_check_branch
        %101 = sbr.rel (%p98) target = $region12
      $region11: #{tpu_custom_call.1} parent=5 // pred_region
        %s102 = ssub.s32 %s15, 1
        // Predicated region
        $region13: #{tpu_custom_call.1} parent=11 // pred_check
          %p103 = pneg %p36
        $region14: #{tpu_custom_call.1} parent=11 // pred_check_branch
          %105 = sbr.rel (%p103) target = $region16
        $region15: #{tpu_custom_call.1} parent=11 // pred_region
          %107 = vsyncadd [#allocation3], 0
          %s108 = sshll.u32 %s0, 4
          %s109 = int_to_ptr.hbm [resolvable:$true] %s108
          %s110 = sshll.u32 [#allocation2], 4
          %s111 = int_to_ptr.vmem [resolvable:$true] %s110
          %116 = dma.hbm_to_vmem [thread:$0]  %s109, 384, %s111, [#allocation3], 64, 64, 4
        $region16: #{tpu_custom_call.1} parent=11 // pred_fallthru
          _
      $region12: #{tpu_custom_call.1} parent=5 // pred_fallthru
        _
      %p117 = scmp.lt.s32.totalorder %s15, 2
      // Predicated region
      $region17: #{tpu_custom_call.1} parent=5 // pred_check
        %p118 = pneg %p117
      $region18: #{tpu_custom_call.1} parent=5 // pred_check_branch
        %120 = sbr.rel (%p118) target = $region20
      $region19: #{tpu_custom_call.1} parent=5 // pred_region
        // Predicated region
        $region21: #{tpu_custom_call.1} parent=19 // pred_check
          %p121 = pneg %p56
        $region22: #{tpu_custom_call.1} parent=19 // pred_check_branch
          %123 = sbr.rel (%p121) target = $region24
        $region23: #{tpu_custom_call.1} parent=19 // pred_region
          %s124 = sand.u32 %s46, 1
          %s125 = scalar_lea.sflag [#allocation6], %s124
          %s126 = sand.u32 %s46, 1
          %s127 = scalar_lea.vmem [#allocation5], %s126
          %129 = vsyncadd %s125, 0
          %s130 = scalar_lea.hbm %s1, %s15
          %s132 = sshll.u32 %s130, 4
          %s133 = int_to_ptr.hbm [resolvable:$true] %s132
          %s134 = sshll.u32 %s127, 4
          %s135 = int_to_ptr.vmem [resolvable:$true] %s134
          %137 = dma.hbm_to_vmem [thread:$0]  %s133, 16, %s135, %s125
        $region24: #{tpu_custom_call.1} parent=19 // pred_fallthru
          _
      $region20: #{tpu_custom_call.1} parent=5 // pred_fallthru
        _
      %p138 = scmp.le.s32.totalorder 1, %s15
      %p139 = scmp.lt.s32.totalorder %s15, 3
      %p140 = pnand %p138, %p139
      %p141 = pneg %p140
      // Predicated region
      $region25: #{tpu_custom_call.1} parent=5 // pred_check
        _
      $region26: #{tpu_custom_call.1} parent=5 // pred_check_branch
        %143 = sbr.rel (%p140) target = $region28
      $region27: #{tpu_custom_call.1} parent=5 // pred_region
        %s144 = ssub.s32 %s15, 1
        // Predicated region
        $region29: #{tpu_custom_call.1} parent=27 // pred_check
          %p145 = pneg %p36
        $region30: #{tpu_custom_call.1} parent=27 // pred_check_branch
          %147 = sbr.rel (%p145) target = $region32
        $region31: #{tpu_custom_call.1} parent=27 // pred_region
          %149 = dma.done [#allocation3], 384
        $region32: #{tpu_custom_call.1} parent=27 // pred_fallthru
          _
        %s150 = sand.u32 %s49, 1
        %s151 = scalar_lea.sflag [#allocation6], %s150
        %s152 = sand.u32 %s49, 1
        %s153 = scalar_lea.vmem [#allocation5], %s152
        // Predicated region
        $region33: #{tpu_custom_call.1} parent=27 // pred_check
          %p154 = pneg %p62
        $region34: #{tpu_custom_call.1} parent=27 // pred_check_branch
          %156 = sbr.rel (%p154) target = $region36
        $region35: #{tpu_custom_call.1} parent=27 // pred_region
          %158 = dma.done %s151, 16
        $region36: #{tpu_custom_call.1} parent=27 // pred_fallthru
          _
        %p159 = pneg %p36
        %p160 = pneg %p33
        %s161 = sand.u32 %s49, 1
        %s162 = scalar_lea.sflag [#allocation6], %s161
        %s163 = sand.u32 %s49, 1
        %s164 = scalar_lea.vmem [#allocation5], %s163
        %p165 = pneg %p62
        %p166 = pneg %p59
        %p167 = pneg %p88
        %p168 = pneg %p85
        %s169 = sand.u32 %s75, 1
        %s170 = scalar_lea.sflag [#allocation4], %s169
        %s171 = sand.u32 %s75, 1
        %s172 = scalar_lea.vmem [#allocation7], %s171
        %v173 = vld [vmem:[#allocation2] sm:$0xf]
        %v174 = vld [vmem:[#allocation2 + $0x4] sm:$0xf]
        %v175 = vld [vmem:[#allocation2 + $0x8] sm:$0xf]
        %v176 = vld [vmem:[#allocation2 + $0xc] sm:$0xf]
        %v177 = vld [vmem:[#allocation2 + $0x10] sm:$0xf]
        %v178 = vld [vmem:[#allocation2 + $0x14] sm:$0xf]
        %v179 = vlaneseq
        %v180 = vshrl.u32 %v179, 7
        %v181 = vadd.s32 %v180, 8
        %v182 = vadd.s32 %v180, 16
        %v183 = vadd.s32 %v180, 24
        %v184 = vadd.s32 %v180, 32
        %v185 = vadd.s32 %v180, 40
        %v186 = vadd.s32 %v180, 48
        %v187 = vadd.s32 %v180, 56
        %v188 = vadd.s32 %v180, 64
        %v189 = vadd.s32 %v180, 72
        %v190 = vadd.s32 %v180, 80
        %v191 = vadd.s32 %v180, 88
        %v192 = vadd.s32 %v180, 96
        %v193 = vadd.s32 %v180, 104
        %v194 = vadd.s32 %v180, 112
        %v195 = vadd.s32 %v180, 120
        %v196 = vld [vmem:[%s153] sm:$0x1]
        %v197 = vshra.s32 %v196, 7
        %v198 = vand.u32 %v196, 127
        %v199 = vperm.slane %v198, 0
        %vm200 = vcmp.eq.s32.totalorder %v180, %v199
        %vm201 = vcmp.eq.s32.totalorder %v181, %v199
        %vm202 = vcmp.eq.s32.totalorder %v182, %v199
        %vm203 = vcmp.eq.s32.totalorder %v183, %v199
        %vm204 = vcmp.eq.s32.totalorder %v184, %v199
        %vm205 = vcmp.eq.s32.totalorder %v185, %v199
        %vm206 = vcmp.eq.s32.totalorder %v186, %v199
        %vm207 = vcmp.eq.s32.totalorder %v187, %v199
        %vm208 = vcmp.eq.s32.totalorder %v188, %v199
        %vm209 = vcmp.eq.s32.totalorder %v189, %v199
        %vm210 = vcmp.eq.s32.totalorder %v190, %v199
        %vm211 = vcmp.eq.s32.totalorder %v191, %v199
        %vm212 = vcmp.eq.s32.totalorder %v192, %v199
        %vm213 = vcmp.eq.s32.totalorder %v193, %v199
        %vm214 = vcmp.eq.s32.totalorder %v194, %v199
        %vm215 = vcmp.eq.s32.totalorder %v195, %v199
        %v216 = vsel %vm200, 1, 0
        %v217 = vsel %vm201, 1, 0
        %v218 = vsel %vm202, 1, 0
        %v219 = vsel %vm203, 1, 0
        %v220 = vsel %vm204, 1, 0
        %v221 = vsel %vm205, 1, 0
        %v222 = vsel %vm206, 1, 0
        %v223 = vsel %vm207, 1, 0
        %v224 = vsel %vm208, 1, 0
        %v225 = vsel %vm209, 1, 0
        %v226 = vsel %vm210, 1, 0
        %v227 = vsel %vm211, 1, 0
        %v228 = vsel %vm212, 1, 0
        %v229 = vsel %vm213, 1, 0
        %v230 = vsel %vm214, 1, 0
        %v231 = vsel %vm215, 1, 0
        %v232 = vcvt.s32.f32 %v216
        %v233 = vcvt.s32.f32 %v217
        %v234 = vcvt.s32.f32 %v218
        %v235 = vcvt.s32.f32 %v219
        %v236 = vcvt.s32.f32 %v220
        %v237 = vcvt.s32.f32 %v221
        %v238 = vcvt.s32.f32 %v222
        %v239 = vcvt.s32.f32 %v223
        %v240 = vcvt.s32.f32 %v224
        %v241 = vcvt.s32.f32 %v225
        %v242 = vcvt.s32.f32 %v226
        %v243 = vcvt.s32.f32 %v227
        %v244 = vcvt.s32.f32 %v228
        %v245 = vcvt.s32.f32 %v229
        %v246 = vcvt.s32.f32 %v230
        %v247 = vcvt.s32.f32 %v231
        %v248 = vpack.c.bf16 %v233, %v232
        %v249 = vpack.c.bf16 %v235, %v234
        %v250 = vpack.c.bf16 %v237, %v236
        %v251 = vpack.c.bf16 %v239, %v238
        %v252 = vpack.c.bf16 %v241, %v240
        %v253 = vpack.c.bf16 %v243, %v242
        %v254 = vpack.c.bf16 %v245, %v244
        %v255 = vpack.c.bf16 %v247, %v246
        %v262 = vunpack.c.l.b16 %v173
        %v263 = vunpack.c.l.b16 %v174
        %v264 = vunpack.c.l.b16 %v175
        %v265 = vunpack.c.l.b16 %v176
        %v266 = vunpack.c.l.b16 %v177
        %v267 = vunpack.c.l.b16 %v178
        %v268 = vpack.c.b16 %v263, %v262
        %v269 = vpack.c.b16 %v265, %v264
        %v270 = vpack.c.b16 %v267, %v266
        %274 = vmatpush.bf16.msra.mxu0 %v255
        %275 = vmatpush.bf16.msra.mxu0 %v254
        %276 = vmatpush.bf16.msra.mxu0 %v253
        %277 = vmatpush.bf16.msra.mxu0 %v252
        %278 = vmatpush.bf16.msra.mxu0 %v251
        %279 = vmatpush.bf16.msra.mxu0 %v250
        %280 = vmatpush.bf16.msra.mxu0 %v249
        %281 = vmatpush.bf16.msra.mxu0 %v248
        %282 = vmatmul.bf16.gmra.mxu0 %v268
        %v283 = vpop.f32.mrf.mxu0
        %v284 = vadd.f32 0.0, %v283
        %v285 = vpop.f32.mrf.mxu0
        %v286 = vadd.f32 0.0, %v285
        %287 = vmatmul.bf16.gmra.mxu0 %v269
        %v288 = vpop.f32.mrf.mxu0
        %v289 = vadd.f32 0.0, %v288
        %v290 = vpop.f32.mrf.mxu0
        %v291 = vadd.f32 0.0, %v290
        %292 = vmatmul.bf16.gmra.mxu0 %v270
        %v293 = vpop.f32.mrf.mxu0
        %v294 = vadd.f32 0.0, %v293
        %v295 = vpop.f32.mrf.mxu0
        %v296 = vadd.f32 0.0, %v295
        %297 = vdwg.mxu0
        %v298 = vadd.f32 %v284, %v289
        %v299 = vadd.f32 %v286, %v291
        %v300 = vadd.f32 %v298, %v294
        %v301 = vadd.f32 %v299, %v296
        %v302 = vperm.slane %v197, 0
        %vm303 = vcmp.eq.s32.totalorder %v180, %v302
        %vm304 = vcmp.eq.s32.totalorder %v181, %v302
        %v305 = vsel %vm303, %v300, 0.0
        %v306 = vsel %vm304, %v301, 0.0
        %v307 = vadd.f32 %v305, %v306
        %v308 = vrot.slane %v307, 4
        %v309 = vadd.f32 %v307, %v308
        %v310 = vrot.slane %v309, 2
        %v311 = vadd.f32 %v309, %v310
        %v312 = vrot.slane %v311, 1
        %v313 = vadd.f32 %v311, %v312
        %314 = vst [vmem:[%s172] sm:$0x1] %v313
        %s315 = sand.u32 %s75, 1
        %s316 = scalar_lea.sflag [#allocation4], %s315
        %s317 = sand.u32 %s75, 1
        %s318 = scalar_lea.vmem [#allocation7], %s317
        // Predicated region
        $region37: #{tpu_custom_call.1} parent=27 // pred_check
          %p319 = pneg %p85
        $region38: #{tpu_custom_call.1} parent=27 // pred_check_branch
          %321 = sbr.rel (%p319) target = $region40
        $region39: #{tpu_custom_call.1} parent=27 // pred_region
          %323 = vsyncadd %s316, 0
          %s324 = scalar_lea.hbm %s2, %s20
          %s326 = sshll.u32 %s318, 4
          %s327 = int_to_ptr.vmem [resolvable:$true] %s326
          %s328 = sshll.u32 %s324, 4
          %s329 = int_to_ptr.hbm [resolvable:$true] %s328
          %331 = dma.vmem_to_hbm [thread:$0]  %s327, 16, %s329, %s316
        $region40: #{tpu_custom_call.1} parent=27 // pred_fallthru
          _
      $region28: #{tpu_custom_call.1} parent=5 // pred_fallthru
        _
      %p332 = scmp.le.s32.totalorder 2, %s15
      // Predicated region
      $region41: #{tpu_custom_call.1} parent=5 // pred_check
        %p333 = pneg %p332
      $region42: #{tpu_custom_call.1} parent=5 // pred_check_branch
        %335 = sbr.rel (%p333) target = $region44
      $region43: #{tpu_custom_call.1} parent=5 // pred_region
        %s336 = ssub.s32 %s15, 2
        // Predicated region
        $region45: #{tpu_custom_call.1} parent=43 // pred_check
          %p337 = pneg %p91
        $region46: #{tpu_custom_call.1} parent=43 // pred_check_branch
          %339 = sbr.rel (%p337) target = $region48
        $region47: #{tpu_custom_call.1} parent=43 // pred_region
          %s340 = sand.u32 %s76, 1
          %s341 = scalar_lea.sflag [#allocation4], %s340
          %s342 = sand.u32 %s76, 1
          %s343 = scalar_lea.vmem [#allocation7], %s342
          %345 = dma.done %s341, 16
        $region48: #{tpu_custom_call.1} parent=43 // pred_fallthru
          _
      $region44: #{tpu_custom_call.1} parent=5 // pred_fallthru
        _
    $region6: #{tpu_custom_call.1} parent=1 // loop_footer
      %s19 = sadd.s32 1, %s15
    $region7: #{tpu_custom_call.1} parent=1 // loop_footer_branch
      %14 = sbr.rel target = $region3
    $region8: #{tpu_custom_call.1} parent=1 // loop_exit
      _
    %346 = vsyncpa [#allocation3], 1
    %s347 = scalar_lea.sflag [#allocation3], 1
    %348 = vsyncpa %s347, 1
    %349 = vsyncpa [#allocation6], 1
    %s350 = scalar_lea.sflag [#allocation6], 1
    %351 = vsyncpa %s350, 1
    %352 = vsyncpa [#allocation4], 1
    %s353 = scalar_lea.sflag [#allocation4], 1
    %354 = vsyncpa %s353, 1

</llo_original>
